<compile_context>
chip_gen: v6e
topology: v6e:2x2x1
jax: 0.10.0
libtpu: 0.0.40
codegen_flags: <defaults>
</compile_context>

<pallas_src>
import jax
import jax.numpy as jnp
from jax.experimental import pallas as pl
from jax.experimental.pallas import tpu as pltpu


def _pooler_kernel(x_ref, w_ref, b_ref, o_ref):
    # x_ref: (TB, H)  token-0 hidden states
    # w_ref: (H, TN)  pre-transposed (in, out) weight tile (possibly bf16)
    # b_ref: (1, TN)  bias tile (f32)
    # o_ref: (TB, TN) output tile
    y = jnp.dot(x_ref[...], w_ref[...], preferred_element_type=jnp.float32)
    y = y + b_ref[...]
    o_ref[...] = jnp.tanh(y).astype(o_ref.dtype)


def _pick_n_tile(h, itemsize, max_tile_bytes=8 * 1024 * 1024):
    """Output-column tile size.

    Prefer exactly two weight tiles (TN = H/2) when that is lane-dense and the
    double-buffered weight tile stays small -- one tile per v7x TensorCore and
    the minimum number of grid steps elsewhere.  Otherwise take the largest
    lane-dense divisor of H; tiny H (not a multiple of 128) falls back to H.
    """
    half = h // 2
    if h % 2 == 0 and half % 128 == 0 and 2 * half * h * itemsize <= max_tile_bytes:
        return half
    best = None
    for tn in range(128, h + 1, 128):
        if h % tn == 0 and 2 * tn * h * itemsize <= max_tile_bytes:
            best = tn
    return best if best is not None else h


def bert_pooler(encoder_output, weight, bias, *,
                weight_dtype=jnp.bfloat16, max_batch_tile=512):
    """BertPooler forward (eval): tanh(encoder_output[:, 0, :] @ weight.T + bias).

    encoder_output: (B, S, H); weight: (H, H) PyTorch (out, in) layout; bias: (H,).
    `weight_dtype` controls the streamed weight precision (bf16 halves HBM bytes
    of this mem-bound H*H stream); accumulation is always f32.
    """
    B, S, H = encoder_output.shape
    out_dtype = encoder_output.dtype

    # One-time parameter prep (in a real serving path, hoist to checkpoint load):
    # transpose to (in, out) so the kernel contracts the leading RHS dim, and
    # cast to the streaming dtype.
    w_t = weight.T.astype(weight_dtype)                    # (H_in, H_out)
    b2 = bias.reshape(1, H).astype(jnp.float32)

    # First-token slice fused into the BlockSpec when the (B, S*H) view keeps a
    # lane-dense (multiple-of-128 or full) minor block of width H.
    if H % 128 == 0 or S == 1:
        x2d = encoder_output.reshape(B, S * H)             # free row-major reshape
    else:
        x2d = encoder_output[:, 0, :]                      # tiny/odd-H fallback

    TN = _pick_n_tile(H, jnp.dtype(weight_dtype).itemsize)
    TB = B if B <= max_batch_tile else max_batch_tile
    grid = (pl.cdiv(H, TN), pl.cdiv(B, TB))                # weight tiles outer, batch inner

    cost = pl.CostEstimate(
        flops=2 * B * H * H,
        transcendentals=B * H,
        bytes_accessed=(H * H * jnp.dtype(weight_dtype).itemsize
                        + B * H * jnp.dtype(encoder_output.dtype).itemsize
                        + B * H * jnp.dtype(out_dtype).itemsize
                        + H * 4),
    )

    out = pl.pallas_call(
        _pooler_kernel,
        out_shape=jax.ShapeDtypeStruct((B, H), out_dtype),
        grid_spec=pltpu.PrefetchScalarGridSpec(
            num_scalar_prefetch=0,
            grid=grid,
            in_specs=[
                # Token-0 rows: columns [0:H) of the (B, S*H) view (or the full
                # (B, H) fallback slice); block index independent of j.
                pl.BlockSpec((TB, H), lambda j, b: (b, 0)),
                # (H, TN) column tile of the pre-transposed weight; constant
                # along the inner batch axis, so it is not re-fetched per b.
                pl.BlockSpec((H, TN), lambda j, b: (0, j)),
                # Bias tile.
                pl.BlockSpec((1, TN), lambda j, b: (0, j)),
            ],
            out_specs=pl.BlockSpec((TB, TN), lambda j, b: (b, j)),
        ),
        compiler_params=pltpu.CompilerParams(
            dimension_semantics=("parallel", "parallel"),
            vmem_limit_bytes=32 * 1024 * 1024,
        ),
        cost_estimate=cost,
    )(x2d, w_t, b2)

    return out


if __name__ == "__main__":
    def _reference(encoder_output, weight, bias):
        return jnp.tanh(encoder_output[:, 0, :] @ weight.T + bias)

    key = jax.random.PRNGKey(0)

    # (B, S, H, weight_dtype, tol)
    cases = [
        (2, 8, 128, jnp.bfloat16, 2e-2),   # fused token-0 slice + bf16 weight stream
        (2, 8, 128, jnp.float32, 1e-5),    # fused path, exact f32 numerics
        (2, 8, 32, jnp.float32, 1e-5),     # tiny-H fallback path (H % 128 != 0)
    ]
    for i, (B, S, H, wdt, tol) in enumerate(cases):
        k_x, k_w, k_b = jax.random.split(jax.random.fold_in(key, i), 3)
        encoder_output = jax.random.normal(k_x, (B, S, H), dtype=jnp.float32)
        # Deterministic synthetic "Linear(H, H)" params (not a checkpoint).
        weight = jax.random.normal(k_w, (H, H), dtype=jnp.float32) * 0.02
        bias = jax.random.normal(k_b, (H,), dtype=jnp.float32) * 0.02

        out = bert_pooler(encoder_output, weight, bias, weight_dtype=wdt)
        out = jax.block_until_ready(out)

        ref = _reference(encoder_output, weight, bias)
        assert out.shape == (B, H)
        assert jnp.allclose(out, ref, atol=tol, rtol=tol), (
            f"case {i}: max abs err = {jnp.max(jnp.abs(out - ref))}")

    print("KERNEL_OK")
</pallas_src>

<mosaic_0001>
module attributes {stable_mosaic.version = 11 : i64} {
  func.func @_pooler_kernel(%arg0: i32, %arg1: i32, %arg2: memref<2x128xf32, #tpu.memory_space<vmem>>, %arg3: memref<128x128xbf16, #tpu.memory_space<vmem>>, %arg4: memref<1x128xf32, #tpu.memory_space<vmem>>, %arg5: memref<2x128xf32, #tpu.memory_space<vmem>>) attributes {dimension_semantics = [#tpu.dimension_semantics<parallel>, #tpu.dimension_semantics<parallel>], iteration_bounds = array<i64: 1, 1>, scalar_prefetch = 0 : i64, scratch_operands = 0 : i64, tpu.core_type = #tpu.core_type<tc>, window_params = [{transform_indices = @transform_0, window_bounds = array<i64: 2, 128>}, {transform_indices = @transform_1, window_bounds = array<i64: 128, 128>}, {transform_indices = @transform_2, window_bounds = array<i64: 1, 128>}, {transform_indices = @transform_3, window_bounds = array<i64: 2, 128>}]} {
    %c0 = arith.constant 0 : index
    %c0_0 = arith.constant 0 : index
    %0 = vector.load %arg2[%c0, %c0_0] : memref<2x128xf32, #tpu.memory_space<vmem>>, vector<2x128xf32>
    %c0_1 = arith.constant 0 : index
    %c0_2 = arith.constant 0 : index
    %1 = vector.load %arg3[%c0_1, %c0_2] : memref<128x128xbf16, #tpu.memory_space<vmem>>, vector<128x128xbf16>
    %cst = arith.constant dense<0.000000e+00> : vector<2x128xf32>
    %2 = tpu.matmul %0, %1, %cst {dimension_numbers = #tpu.dot_dimension_numbers<[1], [0], [0], [1], [0, 0, 1, 1], [], []>} : vector<2x128xf32>, vector<128x128xbf16>, vector<2x128xf32> -> vector<2x128xf32>
    %c0_3 = arith.constant 0 : index
    %c0_4 = arith.constant 0 : index
    %3 = vector.load %arg4[%c0_3, %c0_4] : memref<1x128xf32, #tpu.memory_space<vmem>>, vector<1x128xf32>
    %4 = vector.broadcast %3 : vector<1x128xf32> to vector<2x128xf32>
    %5 = arith.addf %2, %4 : vector<2x128xf32>
    %6 = math.tanh %5 : vector<2x128xf32>
    %c0_5 = arith.constant 0 : index
    %c0_6 = arith.constant 0 : index
    %7 = vector.load %arg5[%c0_5, %c0_6] : memref<2x128xf32, #tpu.memory_space<vmem>>, vector<2x128xf32>
    tpu.vector_store %arg5[%c0_5, %c0_6], %6 {strides = array<i32>} : memref<2x128xf32, #tpu.memory_space<vmem>>, vector<2x128xf32>,
    return
  }
  func.func @transform_0(%arg0: i32, %arg1: i32) -> (i32, i32) {
    %c0_i32 = arith.constant 0 : i32
    %c0_i32_0 = arith.constant 0 : i32
    return %arg1, %c0_i32 : i32, i32
  }
  func.func @transform_1(%arg0: i32, %arg1: i32) -> (i32, i32) {
    %c0_i32 = arith.constant 0 : i32
    %c0_i32_0 = arith.constant 0 : i32
    return %c0_i32, %arg0 : i32, i32
  }
  func.func @transform_2(%arg0: i32, %arg1: i32) -> (i32, i32) {
    %c0_i32 = arith.constant 0 : i32
    %c0_i32_0 = arith.constant 0 : i32
    return %c0_i32, %arg0 : i32, i32
  }
  func.func @transform_3(%arg0: i32, %arg1: i32) -> (i32, i32) {
    %c0_i32 = arith.constant 0 : i32
    return %arg1, %arg0 : i32, i32
  }
}

</mosaic_0001>

<llo_original>
// kernel: tpu_custom_call.1
$region0: #{tpu_custom_call.1}
  #allocation0 [shape = 'u32[]', space=smem, size = 0x4, offset = 0x4, fixed_abs, tag = 'smem constant byte address 0x4 - core index']
  #allocation1 [shape = 'u32[144,128]{1,0:T(1,128)}', space=vmem, size = 0x12000, scoped, tag = 'internal scratch']
  %s0 = inlined_call_operand.hbm [shape: f32[2,1024], index: 0, kind: input, shape index: {}]
  %s1 = inlined_call_operand.hbm [shape: bf16[128,128], index: 1, kind: input, shape index: {}]
  %s2 = inlined_call_operand.vmem [shape: f32[1,128], index: 2, kind: input, shape index: {}]
  %s3 = inlined_call_operand.hbm [shape: f32[2,128], index: 3, kind: output, shape index: {}]
  %s4 = sld [smem:[#allocation0]]
  $region30: #{tpu_custom_call.1} parent=0
    _
  %s6 = ssub.s32 1, %s4
  %s7 = scalar_select 0, %s6, %s4
  $region1: #{tpu_custom_call.1} parent=0
    #allocation2 [shape = 'u8[1024]{0}', space=vmem, size = 0x400, scoped, tag = 'input window, operand 0, single buffered']
    #allocation3 [shape = 's32[1]{0}', space=sflag, size = 0x4, scoped, tag = 'scoped memory for tpu_custom_call.1']
    #allocation4 [shape = 's32[1]{0}', space=sflag, size = 0x4, scoped, tag = 'scoped memory for tpu_custom_call.1']
    #allocation5 [shape = 'u8[32768]{0}', space=vmem, size = 0x8000, scoped, tag = 'input window, operand 1, single buffered']
    #allocation6 [shape = 's32[1]{0}', space=sflag, size = 0x4, scoped, tag = 'scoped memory for tpu_custom_call.1']
    #allocation7 [shape = 'u8[1024]{0}', space=vmem, size = 0x400, scoped, tag = 'output window, operand 0, single buffered']
    %8 = vsyncpa [#allocation3], 0
    %9 = vsyncpa [#allocation6], 0
    %10 = vsyncpa [#allocation4], 0
    // Predicated region
    $region2: #{tpu_custom_call.1} parent=1 // pred_check
      _
    $region3: #{tpu_custom_call.1} parent=1 // pred_check_branch
      %12 = sbr.rel (0) target = $region5
    $region4: #{tpu_custom_call.1} parent=1 // pred_region
      %s14 = ssub.s32 32, 32
      %15 = vsyncadd [#allocation3], %s14
      %s17 = sshll.u32 [#allocation2], 4
      %s18 = int_to_ptr.vmem [resolvable:$true] %s17
      %20 = dma.hbm_to_vmem [thread:$0]  %s0, 32, %s18, [#allocation3]
    $region5: #{tpu_custom_call.1} parent=1 // pred_fallthru
      _
    // Predicated region
    $region6: #{tpu_custom_call.1} parent=1 // pred_check
      _
    $region7: #{tpu_custom_call.1} parent=1 // pred_check_branch
      %22 = sbr.rel (0) target = $region9
    $region8: #{tpu_custom_call.1} parent=1 // pred_region
      %s24 = ssub.s32 1024, 1024
      %25 = vsyncadd [#allocation6], %s24
      %s26 = sshll.u32 [#allocation5], 4
      %s27 = int_to_ptr.vmem [resolvable:$true] %s26
      %32 = dma.hbm_to_vmem [thread:$0]  %s1, 1024, %s27, [#allocation6], 64, 64, 4
    $region9: #{tpu_custom_call.1} parent=1 // pred_fallthru
      _
    // Predicated region
    $region10: #{tpu_custom_call.1} parent=1 // pred_check
      _
    $region11: #{tpu_custom_call.1} parent=1 // pred_check_branch
      %34 = sbr.rel (0) target = $region13
    $region12: #{tpu_custom_call.1} parent=1 // pred_region
      _
    $region13: #{tpu_custom_call.1} parent=1 // pred_fallthru
      _
    // Predicated region
    $region14: #{tpu_custom_call.1} parent=1 // pred_check
      _
    $region15: #{tpu_custom_call.1} parent=1 // pred_check_branch
      %36 = sbr.rel (0) target = $region17
    $region16: #{tpu_custom_call.1} parent=1 // pred_region
      %37 = dma.done [#allocation3], 32
    $region17: #{tpu_custom_call.1} parent=1 // pred_fallthru
      _
    // Predicated region
    $region18: #{tpu_custom_call.1} parent=1 // pred_check
      _
    $region19: #{tpu_custom_call.1} parent=1 // pred_check_branch
      %39 = sbr.rel (0) target = $region21
    $region20: #{tpu_custom_call.1} parent=1 // pred_region
      %40 = dma.done [#allocation6], 1024
    $region21: #{tpu_custom_call.1} parent=1 // pred_fallthru
      _
    %v42 = vld [vmem:[#allocation2] sm:$0x3]
    %v43 = vld [vmem:[#allocation5] sm:$0xf]
    %v44 = vld [vmem:[#allocation5 + $0x4] sm:$0xf]
    %v45 = vld [vmem:[#allocation5 + $0x8] sm:$0xf]
    %v46 = vld [vmem:[#allocation5 + $0xc] sm:$0xf]
    %v47 = vld [vmem:[#allocation5 + $0x10] sm:$0xf]
    %v48 = vld [vmem:[#allocation5 + $0x14] sm:$0xf]
    %v49 = vld [vmem:[#allocation5 + $0x18] sm:$0xf]
    %v50 = vld [vmem:[#allocation5 + $0x1c] sm:$0xf]
    %v51 = vld [vmem:[#allocation5 + $0x20] sm:$0xf]
    %v52 = vld [vmem:[#allocation5 + $0x24] sm:$0xf]
    %v53 = vld [vmem:[#allocation5 + $0x28] sm:$0xf]
    %v54 = vld [vmem:[#allocation5 + $0x2c] sm:$0xf]
    %v55 = vld [vmem:[#allocation5 + $0x30] sm:$0xf]
    %v56 = vld [vmem:[#allocation5 + $0x34] sm:$0xf]
    %v57 = vld [vmem:[#allocation5 + $0x38] sm:$0xf]
    %v58 = vld [vmem:[#allocation5 + $0x3c] sm:$0xf]
    %v59 = vld [vmem:[%s2] sm:$0x1]
    %v61 = vlaneseq
    %v62 = vshrl.u32 %v61, 7
    %v63 = vsub.s32 0, %v62
    %v64 = vrot.slane %v59, %v63
    %v82 = vunpack.c.l.b16 %v43
    %v83 = vunpack.c.l.b16 %v44
    %v84 = vunpack.c.l.b16 %v45
    %v85 = vunpack.c.l.b16 %v46
    %v86 = vunpack.c.l.b16 %v47
    %v87 = vunpack.c.l.b16 %v48
    %v88 = vunpack.c.l.b16 %v49
    %v89 = vunpack.c.l.b16 %v50
    %v90 = vunpack.c.l.b16 %v51
    %v91 = vunpack.c.l.b16 %v52
    %v92 = vunpack.c.l.b16 %v53
    %v93 = vunpack.c.l.b16 %v54
    %v94 = vunpack.c.l.b16 %v55
    %v95 = vunpack.c.l.b16 %v56
    %v96 = vunpack.c.l.b16 %v57
    %v97 = vunpack.c.l.b16 %v58
    %v98 = vpack.c.b16 %v83, %v82
    %v99 = vpack.c.b16 %v85, %v84
    %v100 = vpack.c.b16 %v87, %v86
    %v101 = vpack.c.b16 %v89, %v88
    %v102 = vpack.c.b16 %v91, %v90
    %v103 = vpack.c.b16 %v93, %v92
    %v104 = vpack.c.b16 %v95, %v94
    %v105 = vpack.c.b16 %v97, %v96
    %114 = vmatprep.subr.bf16.mxu0 0
    %115 = vmatpush1.bf16.msra.mxu0 %v105
    %116 = vmatprep.subr.bf16.mxu0 0
    %117 = vmatpush1.bf16.msra.mxu0 %v104
    %118 = vmatprep.subr.bf16.mxu0 0
    %119 = vmatpush1.bf16.msra.mxu0 %v103
    %120 = vmatprep.subr.bf16.mxu0 0
    %121 = vmatpush1.bf16.msra.mxu0 %v102
    %122 = vmatprep.subr.bf16.mxu0 0
    %123 = vmatpush1.bf16.msra.mxu0 %v101
    %124 = vmatprep.subr.bf16.mxu0 0
    %125 = vmatpush1.bf16.msra.mxu0 %v100
    %126 = vmatprep.subr.bf16.mxu0 0
    %127 = vmatpush1.bf16.msra.mxu0 %v99
    %128 = vmatprep.subr.bf16.mxu0 0
    %129 = vmatpush1.bf16.msra.mxu0 %v98
    %130 = vmatprep.subr.bf16.mxu0 0
    %131 = vmatpush2.bf16.msra.mxu0 0
    %132 = vmatprep.subr.bf16.mxu0 0
    %133 = vmatpush2.bf16.msra.mxu0 0
    %134 = vmatprep.subr.bf16.mxu0 0
    %135 = vmatpush2.bf16.msra.mxu0 0
    %136 = vmatprep.subr.bf16.mxu0 0
    %137 = vmatpush2.bf16.msra.mxu0 0
    %138 = vmatprep.subr.bf16.mxu0 0
    %139 = vmatpush2.bf16.msra.mxu0 0
    %140 = vmatprep.subr.bf16.mxu0 0
    %141 = vmatpush2.bf16.msra.mxu0 0
    %142 = vmatprep.subr.bf16.mxu0 0
    %143 = vmatpush2.bf16.msra.mxu0 0
    %144 = vmatprep.subr.bf16.mxu0 0
    %145 = vmatpush2.bf16.msra.mxu0 0
    %146 = vmatprep.mubr.f32.mxu0 0.0
    %147 = vmatmul.mubr.f32.gmra.mxu0 %v42
    %v148 = vpop.f32.mrf.mxu0
    %v149 = vadd.f32 %v64, %v148
    %v150 = vpop.f32.mrf.mxu0
    %151 = vdwg.mxu0
    %v152 = vtanh.pop %v149
    %153 = vst [vmem:[#allocation7] sm:$0x3] %v152
    // Predicated region
    $region22: #{tpu_custom_call.1} parent=1 // pred_check
      _
    $region23: #{tpu_custom_call.1} parent=1 // pred_check_branch
      %155 = sbr.rel (0) target = $region25
    $region24: #{tpu_custom_call.1} parent=1 // pred_region
      %s157 = ssub.s32 32, 32
      %158 = vsyncadd [#allocation4], %s157
      %s160 = sshll.u32 [#allocation7], 4
      %s161 = int_to_ptr.vmem [resolvable:$true] %s160
      %163 = dma.vmem_to_hbm [thread:$0]  %s161, 32, %s3, [#allocation4]
    $region25: #{tpu_custom_call.1} parent=1 // pred_fallthru
      _
    // Predicated region
    $region26: #{tpu_custom_call.1} parent=1 // pred_check
      _
    $region27: #{tpu_custom_call.1} parent=1 // pred_check_branch
      %165 = sbr.rel (0) target = $region29
    $region28: #{tpu_custom_call.1} parent=1 // pred_region
      %166 = dma.done [#allocation4], 32
    $region29: #{tpu_custom_call.1} parent=1 // pred_fallthru
      _
    %167 = vsyncpa [#allocation3], 1
    %168 = vsyncpa [#allocation6], 1
    %169 = vsyncpa [#allocation4], 1

</llo_original>
